<compile_context>
chip_gen: v6e
topology: v6e:2x2x1
jax: 0.10.0
libtpu: 0.0.40
codegen_flags: <defaults>
</compile_context>

<pallas_src>
import functools

import jax
import jax.numpy as jnp
from jax.experimental import pallas as pl
from jax.experimental.pallas import tpu as pltpu


def _round_up(a, b):
    return (a + b - 1) // b * b


def _cdiv(a, b):
    return -(-a // b)


def _vmem_limit_bytes():
    """Scoped VMEM limit sized from the local generation's physical (per-TC) VMEM."""
    phys = 64 * 1024 * 1024  # conservative default (v7x per-TC size)
    try:
        reported = int(pltpu.get_tpu_info().vmem_capacity_bytes)
        if reported > 0:
            phys = reported
    except Exception:
        pass
    # ~60% of physical: ~38 MiB on v7x (64 MiB/TC), ~76 MiB on v5e/v6e (128 MiB).
    return max(32 * 1024 * 1024, min(int(phys * 0.6), 96 * 1024 * 1024))


# ---------- Pass 1: per-channel partial sum / sum-of-squares ------------------

def _stats_kernel(x_ref, psum_ref, psumsq_ref, sum_ref, sumsq_ref,
                  *, m, tm, tiles_per_split):
    i = pl.program_id(1)

    @pl.when(i == 0)
    def _():
        sum_ref[...] = jnp.zeros_like(sum_ref)
        sumsq_ref[...] = jnp.zeros_like(sumsq_ref)

    tile_idx = pl.program_id(0) * tiles_per_split + i
    row0 = tile_idx * tm
    x = x_ref[...].astype(jnp.float32)
    is_full = row0 + tm <= m  # tile lies fully inside the valid M rows

    @pl.when(is_full)
    def _():
        sum_ref[...] += jnp.sum(x, axis=0, keepdims=True)
        sumsq_ref[...] += jnp.sum(x * x, axis=0, keepdims=True)

    @pl.when(jnp.logical_not(is_full))
    def _():
        # Ragged / duplicated boundary tile: zero rows >= m before accumulating.
        rid = row0 + jax.lax.broadcasted_iota(jnp.int32, (tm, 1), 0)
        xm = jnp.where(rid < m, x, 0.0)
        sum_ref[...] += jnp.sum(xm, axis=0, keepdims=True)
        sumsq_ref[...] += jnp.sum(xm * xm, axis=0, keepdims=True)

    @pl.when(i == pl.num_programs(1) - 1)
    def _():
        psum_ref[...] = sum_ref[...][None]
        psumsq_ref[...] = sumsq_ref[...][None]


# ---------- Pass 2: y = x * scale + shift -------------------------------------

def _normalize_kernel(scale_ref, shift_ref, x_ref, o_ref):
    o_ref[...] = (x_ref[...] * scale_ref[...] + shift_ref[...]).astype(o_ref.dtype)


# ---------- Fused single-slab fast path (small inputs) ------------------------

def _fused_kernel(x_ref, gamma_ref, beta_ref, o_ref, *, m_true, eps):
    x = x_ref[...].astype(jnp.float32)
    inv_m = 1.0 / m_true
    mean = jnp.sum(x, axis=0, keepdims=True) * inv_m
    var = jnp.maximum(jnp.sum(x * x, axis=0, keepdims=True) * inv_m - mean * mean, 0.0)
    inv_std = jax.lax.rsqrt(var + eps)
    scale = gamma_ref[...] * inv_std
    shift = beta_ref[...] - mean * scale
    o_ref[...] = (x * scale + shift).astype(o_ref.dtype)


def batch_norm(x, gamma, beta, *, eps=1e-5, force_tiled=False, max_tile_rows=None):
    """x: (..., C). gamma, beta: (C,). BatchNorm1d training-mode math over all rows."""
    orig_shape = x.shape
    c = orig_shape[-1]
    x2d = x.reshape(-1, c)  # layout-preserving reshape (no pad / copy round trip)
    m = x2d.shape[0]

    in_bytes = x.dtype.itemsize
    out_bytes = in_bytes
    # Sublane alignment for the row (second-to-last) block dim per dtype packing.
    row_align = 8 if in_bytes >= 4 else (16 if in_bytes == 2 else 32)

    vmem_limit = _vmem_limit_bytes()
    budget = vmem_limit - 4 * 1024 * 1024  # headroom for (1,C) buffers & scratch

    gamma_f = gamma.astype(jnp.float32).reshape(1, c)
    beta_f = beta.astype(jnp.float32).reshape(1, c)

    # ---- Fused resident-slab fast path: 1 HBM read + 1 write ----
    fused_bytes = m * c * (in_bytes + out_bytes + 12)  # x + out + f32 temporaries
    if not force_tiled and fused_bytes <= vmem_limit // 2:
        out2d = pl.pallas_call(
            functools.partial(_fused_kernel, m_true=float(m), eps=eps),
            out_shape=jax.ShapeDtypeStruct((m, c), x.dtype),
            grid_spec=pltpu.PrefetchScalarGridSpec(
                num_scalar_prefetch=0,
                grid=(1,),
                in_specs=[
                    pl.BlockSpec((m, c), lambda i: (0, 0)),
                    pl.BlockSpec((1, c), lambda i: (0, 0)),
                    pl.BlockSpec((1, c), lambda i: (0, 0)),
                ],
                out_specs=pl.BlockSpec((m, c), lambda i: (0, 0)),
            ),
            compiler_params=pltpu.CompilerParams(
                dimension_semantics=("arbitrary",),
                vmem_limit_bytes=vmem_limit,
            ),
        )(x2d, gamma_f, beta_f)
        return out2d.reshape(orig_shape)

    # ---- Tile sizing (independent per pass, from the real VMEM budget) ----
    def _tile_rows(per_row_bytes):
        rows = max(row_align, (budget // per_row_bytes) // row_align * row_align)
        rows = min(rows, _round_up(m, row_align))
        if max_tile_rows is not None:  # test / debug hook
            rows = max(row_align, min(rows, _round_up(max_tile_rows, row_align)))
        return rows

    # Pass 1 holds x double-buffered plus ~2 f32 full-tile compute temporaries.
    tm1 = _tile_rows(c * (2 * in_bytes + 12))
    # Pass 2 holds x and out double-buffered plus ~1 f32 full-tile temporary.
    tm2 = _tile_rows(c * (2 * (in_bytes + out_bytes) + 8))

    n1 = _cdiv(m, tm1)
    split = 2 if n1 >= 2 else 1  # leading "parallel" axis -> megacore split on v7x
    tps = _cdiv(n1, split)       # row tiles per split

    def x1_index_map(s, i):
        # Clamp duplicated tail tiles (split*tps may exceed n1); the kernel masks
        # their rows to zero, so redundantly re-reading the last valid tile is safe.
        return (jnp.minimum(s * tps + i, n1 - 1), 0)

    psum, psumsq = pl.pallas_call(
        functools.partial(_stats_kernel, m=m, tm=tm1, tiles_per_split=tps),
        out_shape=(jax.ShapeDtypeStruct((split, 1, c), jnp.float32),
                   jax.ShapeDtypeStruct((split, 1, c), jnp.float32)),
        grid_spec=pltpu.PrefetchScalarGridSpec(
            num_scalar_prefetch=0,
            grid=(split, tps),
            in_specs=[pl.BlockSpec((tm1, c), x1_index_map)],
            out_specs=[
                pl.BlockSpec((1, 1, c), lambda s, i: (s, 0, 0)),
                pl.BlockSpec((1, 1, c), lambda s, i: (s, 0, 0)),
            ],
            scratch_shapes=[
                pltpu.VMEM((1, c), jnp.float32),  # running sum
                pltpu.VMEM((1, c), jnp.float32),  # running sum of squares
            ],
        ),
        compiler_params=pltpu.CompilerParams(
            dimension_semantics=("parallel", "arbitrary"),
            vmem_limit_bytes=vmem_limit,
        ),
    )(x2d)

    # Tiny pure-JAX finalize: combine per-split partials, fold gamma/beta.
    inv_m = 1.0 / m
    mean = jnp.sum(psum, axis=0) * inv_m                              # (1, C)
    var = jnp.maximum(jnp.sum(psumsq, axis=0) * inv_m - mean * mean, 0.0)
    inv_std = jax.lax.rsqrt(var + eps)
    scale = gamma_f * inv_std
    shift = beta_f - mean * scale

    n2 = _cdiv(m, tm2)
    out2d = pl.pallas_call(
        _normalize_kernel,
        out_shape=jax.ShapeDtypeStruct((m, c), x.dtype),
        grid_spec=pltpu.PrefetchScalarGridSpec(
            num_scalar_prefetch=0,
            grid=(n2,),
            in_specs=[
                pl.BlockSpec((1, c), lambda i: (0, 0)),
                pl.BlockSpec((1, c), lambda i: (0, 0)),
                pl.BlockSpec((tm2, c), lambda i: (i, 0)),
            ],
            out_specs=pl.BlockSpec((tm2, c), lambda i: (i, 0)),
        ),
        compiler_params=pltpu.CompilerParams(
            dimension_semantics=("parallel",),
            vmem_limit_bytes=vmem_limit,
        ),
    )(scale, shift, x2d)

    return out2d.reshape(orig_shape)


def _reference(x, gamma, beta, eps):
    c = x.shape[-1]
    x2d = x.reshape(-1, c).astype(jnp.float32)
    mean = jnp.mean(x2d, axis=0, keepdims=True)
    var = jnp.mean((x2d - mean) ** 2, axis=0, keepdims=True)
    y = (x2d - mean) * jax.lax.rsqrt(var + eps) * gamma + beta
    return y.reshape(x.shape).astype(x.dtype)


if __name__ == "__main__":
    key = jax.random.PRNGKey(0)
    k1, k2, k3, k4 = jax.random.split(key, 4)
    eps = 1e-5

    # 1) Small (N, L, C): fused resident-slab path, C < 128 via full-dim block.
    x1 = jax.random.normal(k1, (2, 8, 32), dtype=jnp.float32)
    g1 = 1.0 + 0.01 * jnp.arange(32, dtype=jnp.float32)
    b1 = 0.1 * jnp.arange(32, dtype=jnp.float32)
    o1 = jax.block_until_ready(batch_norm(x1, g1, b1, eps=eps))
    r1 = _reference(x1, g1, b1, eps)
    assert o1.shape == x1.shape
    assert jnp.allclose(o1, r1, atol=2e-5, rtol=2e-5)

    # 2) Fused path with both dims unaligned (M = 21 rows, C = 33 channels);
    #    exercises the no-padding full-dim block handling.
    x2 = jax.random.normal(k2, (3, 7, 33), dtype=jnp.float32)
    g2 = jnp.linspace(0.5, 1.5, 33, dtype=jnp.float32)
    b2 = jnp.linspace(-0.2, 0.2, 33, dtype=jnp.float32)
    o2 = jax.block_until_ready(batch_norm(x2, g2, b2, eps=eps))
    r2 = _reference(x2, g2, b2, eps)
    assert o2.shape == x2.shape
    assert jnp.allclose(o2, r2, atol=2e-5, rtol=2e-5)

    # 3) Tiled two-pass path with small forced tiles: exercises the 2-way
    #    "parallel" stats split, the masked ragged last tile, and pass-2
    #    boundary-block writes (M = 1200 rows, 128-row tiles -> 10 tiles).
    x3 = jax.random.normal(k3, (4, 300, 48), dtype=jnp.float32)
    g3 = jnp.full((48,), 0.9, dtype=jnp.float32)
    b3 = jnp.full((48,), 0.05, dtype=jnp.float32)
    o3 = jax.block_until_ready(
        batch_norm(x3, g3, b3, eps=eps, force_tiled=True, max_tile_rows=128))
    r3 = _reference(x3, g3, b3, eps)
    assert o3.shape == x3.shape
    assert jnp.allclose(o3, r3, atol=2e-5, rtol=2e-5)

    # 4) bf16 tiled path (16-row sublane alignment) with a ragged last tile.
    x4 = jax.random.normal(k4, (2, 104, 64), dtype=jnp.bfloat16)
    g4 = jnp.full((64,), 1.1, dtype=jnp.float32)
    b4 = jnp.full((64,), -0.05, dtype=jnp.float32)
    o4 = jax.block_until_ready(
        batch_norm(x4, g4, b4, eps=eps, force_tiled=True, max_tile_rows=64))
    r4 = _reference(x4, g4, b4, eps)
    assert o4.shape == x4.shape and o4.dtype == x4.dtype
    assert jnp.allclose(o4.astype(jnp.float32), r4.astype(jnp.float32),
                        atol=1e-1, rtol=5e-2)

    print("KERNEL_OK")
</pallas_src>

<mosaic_0001>
module attributes {stable_mosaic.version = 11 : i64} {
  func.func @_fused_kernel(%arg0: i32, %arg1: memref<16x32xf32, #tpu.memory_space<vmem>>, %arg2: memref<1x32xf32, #tpu.memory_space<vmem>>, %arg3: memref<1x32xf32, #tpu.memory_space<vmem>>, %arg4: memref<16x32xf32, #tpu.memory_space<vmem>>) attributes {dimension_semantics = [#tpu.dimension_semantics<arbitrary>], iteration_bounds = array<i64: 1>, scalar_prefetch = 0 : i64, scratch_operands = 0 : i64, tpu.core_type = #tpu.core_type<tc>, window_params = [{pipeline_mode = #tpu.pipeline_mode<synchronous>, transform_indices = @transform_0, window_bounds = array<i64: 16, 32>}, {pipeline_mode = #tpu.pipeline_mode<synchronous>, transform_indices = @transform_1, window_bounds = array<i64: 1, 32>}, {pipeline_mode = #tpu.pipeline_mode<synchronous>, transform_indices = @transform_2, window_bounds = array<i64: 1, 32>}, {pipeline_mode = #tpu.pipeline_mode<synchronous>, transform_indices = @transform_3, window_bounds = array<i64: 16, 32>}]} {
    %c0 = arith.constant 0 : index
    %c0_0 = arith.constant 0 : index
    %0 = vector.load %arg1[%c0, %c0_0] : memref<16x32xf32, #tpu.memory_space<vmem>>, vector<16x32xf32>
    %cst = arith.constant dense<0.000000e+00> : vector<32xf32>
    %1 = vector.multi_reduction <add>, %0, %cst [0] : vector<16x32xf32> to vector<32xf32>
    %2 = vector.shape_cast %1 : vector<32xf32> to vector<1x32xf32>
    %cst_1 = arith.constant 6.250000e-02 : f32
    %3 = vector.broadcast %cst_1 : f32 to vector<1x32xf32>
    %4 = arith.mulf %2, %3 : vector<1x32xf32>
    %5 = arith.mulf %0, %0 : vector<16x32xf32>
    %cst_2 = arith.constant dense<0.000000e+00> : vector<32xf32>
    %6 = vector.multi_reduction <add>, %5, %cst_2 [0] : vector<16x32xf32> to vector<32xf32>
    %7 = vector.shape_cast %6 : vector<32xf32> to vector<1x32xf32>
    %cst_3 = arith.constant 6.250000e-02 : f32
    %8 = vector.broadcast %cst_3 : f32 to vector<1x32xf32>
    %9 = arith.mulf %7, %8 : vector<1x32xf32>
    %10 = arith.mulf %4, %4 : vector<1x32xf32>
    %11 = arith.subf %9, %10 : vector<1x32xf32>
    %cst_4 = arith.constant 0.000000e+00 : f32
    %12 = vector.broadcast %cst_4 : f32 to vector<1x32xf32>
    %13 = arith.maximumf %11, %12 : vector<1x32xf32>
    %cst_5 = arith.constant 9.99999974E-6 : f32
    %14 = vector.broadcast %cst_5 : f32 to vector<1x32xf32>
    %15 = arith.addf %13, %14 : vector<1x32xf32>
    %16 = math.rsqrt %15 : vector<1x32xf32>
    %c0_6 = arith.constant 0 : index
    %c0_7 = arith.constant 0 : index
    %17 = vector.load %arg2[%c0_6, %c0_7] : memref<1x32xf32, #tpu.memory_space<vmem>>, vector<1x32xf32>
    %18 = arith.mulf %17, %16 : vector<1x32xf32>
    %c0_8 = arith.constant 0 : index
    %c0_9 = arith.constant 0 : index
    %19 = vector.load %arg3[%c0_8, %c0_9] : memref<1x32xf32, #tpu.memory_space<vmem>>, vector<1x32xf32>
    %20 = arith.mulf %4, %18 : vector<1x32xf32>
    %21 = arith.subf %19, %20 : vector<1x32xf32>
    %22 = vector.broadcast %18 : vector<1x32xf32> to vector<16x32xf32>
    %23 = arith.mulf %0, %22 : vector<16x32xf32>
    %24 = vector.broadcast %21 : vector<1x32xf32> to vector<16x32xf32>
    %25 = arith.addf %23, %24 : vector<16x32xf32>
    %c0_10 = arith.constant 0 : index
    %c0_11 = arith.constant 0 : index
    %26 = vector.load %arg4[%c0_10, %c0_11] : memref<16x32xf32, #tpu.memory_space<vmem>>, vector<16x32xf32>
    tpu.vector_store %arg4[%c0_10, %c0_11], %25 {strides = array<i32>} : memref<16x32xf32, #tpu.memory_space<vmem>>, vector<16x32xf32>,
    return
  }
  func.func @transform_0(%arg0: i32) -> (i32, i32) {
    %c0_i32 = arith.constant 0 : i32
    %c0_i32_0 = arith.constant 0 : i32
    %c0_i32_1 = arith.constant 0 : i32
    return %c0_i32, %c0_i32_0 : i32, i32
  }
  func.func @transform_1(%arg0: i32) -> (i32, i32) {
    %c0_i32 = arith.constant 0 : i32
    %c0_i32_0 = arith.constant 0 : i32
    %c0_i32_1 = arith.constant 0 : i32
    return %c0_i32, %c0_i32_0 : i32, i32
  }
  func.func @transform_2(%arg0: i32) -> (i32, i32) {
    %c0_i32 = arith.constant 0 : i32
    %c0_i32_0 = arith.constant 0 : i32
    %c0_i32_1 = arith.constant 0 : i32
    return %c0_i32, %c0_i32_0 : i32, i32
  }
  func.func @transform_3(%arg0: i32) -> (i32, i32) {
    %c0_i32 = arith.constant 0 : i32
    %c0_i32_0 = arith.constant 0 : i32
    %c0_i32_1 = arith.constant 0 : i32
    return %c0_i32, %c0_i32_0 : i32, i32
  }
}

</mosaic_0001>

<llo_original>
// kernel: tpu_custom_call.1
$region0: #{tpu_custom_call.1}
  #allocation0 [shape = 'u32[]', space=smem, size = 0x4, offset = 0x4, fixed_abs, tag = 'smem constant byte address 0x4 - core index']
  #allocation1 [shape = 'u32[144,128]{1,0:T(1,128)}', space=vmem, size = 0x12000, scoped, tag = 'internal scratch']
  %s0 = inlined_call_operand.hbm [shape: f32[16,32], index: 0, kind: input, shape index: {}]
  %s1 = inlined_call_operand.vmem [shape: f32[1,32], index: 1, kind: input, shape index: {}]
  %s2 = inlined_call_operand.vmem [shape: f32[1,32], index: 2, kind: input, shape index: {}]
  %s3 = inlined_call_operand.hbm [shape: f32[16,32], index: 3, kind: output, shape index: {}]
  %s4 = sld [smem:[#allocation0]]
  $region26: #{tpu_custom_call.1} parent=0
    _
  %s6 = ssub.s32 1, %s4
  %s7 = scalar_select 0, %s6, %s4
  $region1: #{tpu_custom_call.1} parent=0
    #allocation2 [shape = 'u8[8192]{0}', space=vmem, size = 0x2000, scoped, tag = 'input window, operand 0, single buffered']
    #allocation3 [shape = 's32[1]{0}', space=sflag, size = 0x4, scoped, tag = 'scoped memory for tpu_custom_call.1']
    #allocation4 [shape = 's32[1]{0}', space=sflag, size = 0x4, scoped, tag = 'scoped memory for tpu_custom_call.1']
    #allocation5 [shape = 'u8[8192]{0}', space=vmem, size = 0x2000, scoped, tag = 'output window, operand 0, single buffered']
    %8 = vsyncpa [#allocation3], 0
    %9 = vsyncpa [#allocation4], 0
    // Predicated region
    $region2: #{tpu_custom_call.1} parent=1 // pred_check
      _
    $region3: #{tpu_custom_call.1} parent=1 // pred_check_branch
      %11 = sbr.rel (0) target = $region5
    $region4: #{tpu_custom_call.1} parent=1 // pred_region
      %s13 = ssub.s32 256, 256
      %14 = vsyncadd [#allocation3], %s13
      %s15 = sshll.u32 [#allocation2], 4
      %s16 = int_to_ptr.vmem [resolvable:$true] %s15
      %21 = dma.hbm_to_vmem [thread:$0]  %s0, 256, %s16, [#allocation3], 128, 128, 8
    $region5: #{tpu_custom_call.1} parent=1 // pred_fallthru
      _
    // Predicated region
    $region6: #{tpu_custom_call.1} parent=1 // pred_check
      _
    $region7: #{tpu_custom_call.1} parent=1 // pred_check_branch
      %23 = sbr.rel (0) target = $region9
    $region8: #{tpu_custom_call.1} parent=1 // pred_region
      _
    $region9: #{tpu_custom_call.1} parent=1 // pred_fallthru
      _
    // Predicated region
    $region10: #{tpu_custom_call.1} parent=1 // pred_check
      _
    $region11: #{tpu_custom_call.1} parent=1 // pred_check_branch
      %25 = sbr.rel (0) target = $region13
    $region12: #{tpu_custom_call.1} parent=1 // pred_region
      _
    $region13: #{tpu_custom_call.1} parent=1 // pred_fallthru
      _
    // Predicated region
    $region14: #{tpu_custom_call.1} parent=1 // pred_check
      _
    $region15: #{tpu_custom_call.1} parent=1 // pred_check_branch
      %27 = sbr.rel (0) target = $region17
    $region16: #{tpu_custom_call.1} parent=1 // pred_region
      %28 = dma.done [#allocation3], 256
    $region17: #{tpu_custom_call.1} parent=1 // pred_fallthru
      _
    %v29 = vld [vmem:[#allocation2] sm:$0xff]
    %v30 = vld [vmem:[#allocation2 + $0x8] sm:$0xff]
    %vm31 = vcmask 261120
    %v32 = vsel %vm31, %v29, 0.0
    %v33 = vsel %vm31, %v30, 0.0
    %v34 = vadd.f32 %v32, %v33
    %v35 = vrot.slane %v34, 4
    %v36 = vadd.f32 %v34, %v35
    %v37 = vrot.slane %v36, 2
    %v38 = vadd.f32 %v36, %v37
    %v39 = vrot.slane %v38, 1
    %v40 = vadd.f32 %v38, %v39
    %v41 = vmul.f32 %v40, 0.0625
    %v42 = vmul.f32 %v29, %v29
    %v43 = vmul.f32 %v30, %v30
    %v44 = vsel %vm31, %v42, 0.0
    %v45 = vsel %vm31, %v43, 0.0
    %v46 = vadd.f32 %v44, %v45
    %v47 = vrot.slane %v46, 4
    %v48 = vadd.f32 %v46, %v47
    %v49 = vrot.slane %v48, 2
    %v50 = vadd.f32 %v48, %v49
    %v51 = vrot.slane %v50, 1
    %v52 = vadd.f32 %v50, %v51
    %v53 = vmul.f32 %v52, 0.0625
    %v54 = vmul.f32 %v41, %v41
    %v55 = vsub.f32 %v53, %v54
    %v56 = vmax.f32 %v55, 0.0
    %v57 = vadd.f32 %v56, 1e-05
    %v58 = vrsqrt.pop %v57
    %v59 = vld [vmem:[%s1] sm:$0x1]
    %v60 = vmul.f32 %v59, %v58
    %v61 = vld [vmem:[%s2] sm:$0x1]
    %v62 = vmul.f32 %v41, %v60
    %v63 = vsub.f32 %v61, %v62
    %v65 = vlaneseq
    %v66 = vshrl.u32 %v65, 7
    %v67 = vsub.s32 0, %v66
    %v68 = vrot.slane %v60, %v67
    %v70 = vmul.f32 %v29, %v68
    %v71 = vmul.f32 %v30, %v68
    %v73 = vlaneseq
    %v74 = vshrl.u32 %v73, 7
    %v75 = vsub.s32 0, %v74
    %v76 = vrot.slane %v63, %v75
    %v78 = vadd.f32 %v70, %v76
    %v79 = vadd.f32 %v71, %v76
    %80 = vst.msk [vmem:[#allocation5] sm:$0xff] %vm31, %v78
    %81 = vst.msk [vmem:[#allocation5 + $0x8] sm:$0xff] %vm31, %v79
    // Predicated region
    $region18: #{tpu_custom_call.1} parent=1 // pred_check
      _
    $region19: #{tpu_custom_call.1} parent=1 // pred_check_branch
      %83 = sbr.rel (0) target = $region21
    $region20: #{tpu_custom_call.1} parent=1 // pred_region
      %s85 = ssub.s32 256, 256
      %86 = vsyncadd [#allocation4], %s85
      %s87 = sshll.u32 [#allocation5], 4
      %s88 = int_to_ptr.vmem [resolvable:$true] %s87
      %93 = dma.vmem_to_hbm [thread:$0]  %s88, 256, %s3, [#allocation4], 128, 128, 8
    $region21: #{tpu_custom_call.1} parent=1 // pred_fallthru
      _
    // Predicated region
    $region22: #{tpu_custom_call.1} parent=1 // pred_check
      _
    $region23: #{tpu_custom_call.1} parent=1 // pred_check_branch
      %95 = sbr.rel (0) target = $region25
    $region24: #{tpu_custom_call.1} parent=1 // pred_region
      %96 = dma.done [#allocation4], 256
    $region25: #{tpu_custom_call.1} parent=1 // pred_fallthru
      _
    %97 = vsyncpa [#allocation3], 1
    %98 = vsyncpa [#allocation4], 1

</llo_original>
